<compile_context>
chip_gen: v7x
topology: tpu7x:2x2x1
jax: 0.10.0
libtpu: 0.0.40
codegen_flags: <defaults>
</compile_context>

<pallas_src>
import jax
import jax.numpy as jnp
from jax.experimental import pallas as pl
from jax.experimental.pallas import tpu as pltpu

# ---- constants matching PhysicsInformedLoss.__init__ defaults -------------
MASS = 0.005
DRAG_COEFFICIENT = 0.6
LIFT_COEFFICIENT = 0.4
AIR_DENSITY = 1.225
GRAVITY = 9.81
FPS = 30
DT = 1.0 / FPS
LAMBDA_PHYSICS = 0.1
LAMBDA_SMOOTH = 0.05


def _make_kernel(b_real, b_tile, t_real, t_pad, need_bmask):
    c_drag = -0.5 * AIR_DENSITY * DRAG_COEFFICIENT
    c_mag = 0.5 * AIR_DENSITY * LIFT_COEFFICIENT
    k_pos = 0.5 * DT * DT / MASS          # 1/MASS folded into multiplies
    k_vel = DT / MASS
    sh1 = (t_pad - 1) % t_pad             # == roll(shift=-1): col t <- col t+1
    sh2 = (t_pad - 2) % t_pad             # == roll(shift=-2): col t <- col t+2

    def kernel(tp_ref, vp_ref, rp_ref, tg_ref, vg_ref, m_ref, out_ref):
        # component planes: each leading-dim index is its own aligned 2D tile
        px, py, pz = tp_ref[0], tp_ref[1], tp_ref[2]   # predicted positions
        vx, vy, vz = vp_ref[0], vp_ref[1], vp_ref[2]   # predicted velocities
        wx, wy, wz = rp_ref[0], rp_ref[1], rp_ref[2]   # predicted angular vel.
        gx, gy, gz = tg_ref[0], tg_ref[1], tg_ref[2]   # gt positions
        ux, uy, uz = vg_ref[0], vg_ref[1], vg_ref[2]   # gt velocities
        m = m_ref[...]                                 # {0,1} mask (0 on padding)

        # ---- supervised masked-MSE partial sums ----------------------------
        s_traj = jnp.sum(((px - gx) ** 2 + (py - gy) ** 2 + (pz - gz) ** 2) * m)
        s_vel = jnp.sum(((vx - ux) ** 2 + (vy - uy) ** 2 + (vz - uz) ** 2) * m)
        s_mask = jnp.sum(m)

        # ---- validity weights over the padded (b_tile, t_pad) plane --------
        t_idx = jax.lax.broadcasted_iota(jnp.int32, (b_tile, t_pad), 1)
        v1 = t_idx < (t_real - 1)          # physics steps t -> t+1
        v2 = t_idx < (t_real - 2)          # second differences
        if need_bmask:                     # only emitted when batch was padded
            b_idx = (jax.lax.broadcasted_iota(jnp.int32, (b_tile, t_pad), 0)
                     + pl.program_id(0) * b_tile)
            bok = b_idx < b_real
            v1 = jnp.logical_and(v1, bok)
            v2 = jnp.logical_and(v2, bok)
        w1 = v1.astype(jnp.float32)
        w2 = v2.astype(jnp.float32)

        # ---- t+1 / t+2 alignment via XLU lane rolls (no lane-offset slices);
        #      wrapped / padded columns are killed by w1 / w2 ----------------
        def nxt(a):
            return pltpu.roll(a, sh1, axis=1)

        def nxt2(a):
            return pltpu.roll(a, sh2, axis=1)

        px1, py1, pz1 = nxt(px), nxt(py), nxt(pz)
        vx1, vy1, vz1 = nxt(vx), nxt(vy), nxt(vz)
        vx2, vy2, vz2 = nxt2(vx), nxt2(vy), nxt2(vz)

        # ---- physics-consistency partial sum --------------------------------
        speed = jnp.sqrt(vx * vx + vy * vy + vz * vz)
        fx = c_drag * speed * vx + c_mag * (wy * vz - wz * vy)
        fy = c_drag * speed * vy + c_mag * (wz * vx - wx * vz)
        fz = c_drag * speed * vz + c_mag * (wx * vy - wy * vx) - GRAVITY

        e_pos = ((px1 - (px + vx * DT + fx * k_pos)) ** 2
                 + (py1 - (py + vy * DT + fy * k_pos)) ** 2
                 + (pz1 - (pz + vz * DT + fz * k_pos)) ** 2)
        e_vel = ((vx1 - (vx + fx * k_vel)) ** 2
                 + (vy1 - (vy + fy * k_vel)) ** 2
                 + (vz1 - (vz + fz * k_vel)) ** 2)
        s_phys = jnp.sum((e_pos + e_vel) * w1)

        # ---- smoothness partial sum (1/DT^4 folded into wrapper scale) -----
        d2x = vx2 - 2.0 * vx1 + vx
        d2y = vy2 - 2.0 * vy1 + vy
        d2z = vz2 - 2.0 * vz1 + vz
        s_smooth = jnp.sum((d2x * d2x + d2y * d2y + d2z * d2z) * w2)

        # ---- per-tile partial sums -> lane-dense (1, 8, 128) output block --
        row = jax.lax.broadcasted_iota(jnp.int32, out_ref.shape, 1)
        out_ref[...] = (jnp.where(row == 0, s_traj, 0.0)
                        + jnp.where(row == 1, s_vel, 0.0)
                        + jnp.where(row == 2, s_mask, 0.0)
                        + jnp.where(row == 3, s_phys, 0.0)
                        + jnp.where(row == 4, s_smooth, 0.0)).astype(out_ref.dtype)

    return kernel


def physics_informed_loss(pred_traj, pred_vel, pred_rot, gt_traj, gt_vel, masks):
    """pred_*/gt_*: (B, T, 3); masks: (B, T) bool or {0,1}. Returns dict of scalars."""
    B, T, _ = pred_traj.shape
    t_pad = ((T + 127) // 128) * 128

    # Batch tile: largest row count (multiple of 8) keeping ~80 live f32
    # (rows, t_pad) planes (2x-buffered inputs + intermediates) under ~8 MiB,
    # safe vs. the default scoped-VMEM limit on v5e / v6e / v7x.
    bytes_per_row = 80 * 4 * t_pad
    max_rows = max(8, ((8 << 20) // bytes_per_row) // 8 * 8)
    if B <= max_rows:
        b_tile, b_pad = B, B              # full-extent block, no batch padding
    else:
        b_tile = max_rows
        b_pad = ((B + b_tile - 1) // b_tile) * b_tile
    n_tiles = b_pad // b_tile
    need_bmask = b_pad != B

    # TODO(synk): producing the component-major (3, B, T) layout upstream would
    # remove this single HBM relayout pass (transpose + pad fuse into one op).
    def prep(x):
        x = jnp.transpose(x.astype(jnp.float32), (2, 0, 1))          # (3, B, T)
        return jnp.pad(x, ((0, 0), (0, b_pad - B), (0, t_pad - T)))

    m = jnp.pad(masks.astype(jnp.float32), ((0, b_pad - B), (0, t_pad - T)))

    kernel = _make_kernel(B, b_tile, T, t_pad, need_bmask)
    partials = pl.pallas_call(
        kernel,
        out_shape=jax.ShapeDtypeStruct((n_tiles, 8, 128), jnp.float32),
        grid=(n_tiles,),
        in_specs=[pl.BlockSpec((3, b_tile, t_pad), lambda i: (0, i, 0))] * 5
        + [pl.BlockSpec((b_tile, t_pad), lambda i: (i, 0))],
        out_specs=pl.BlockSpec((1, 8, 128), lambda i: (i, 0, 0)),
        compiler_params=pltpu.CompilerParams(
            dimension_semantics=("parallel",)),   # batch tiles shard across TCs
    )(prep(pred_traj), prep(pred_vel), prep(pred_rot),
      prep(gt_traj), prep(gt_vel), m)

    # tiny final reduction + normalization in the wrapper (keeps grid parallel)
    tot = jnp.sum(partials[:, :5, 0], axis=0)      # (5,)
    n_valid = tot[2] * 3.0                         # NaN if mask all-False (same as ref)
    loss_traj = tot[0] / n_valid
    loss_vel = tot[1] / n_valid
    loss_phys = tot[3] / (B * 3.0) * LAMBDA_PHYSICS
    losses = {"loss_trajectory": loss_traj,
              "loss_velocity": loss_vel,
              "loss_physics": loss_phys}
    total = loss_traj + loss_vel + loss_phys
    if T > 2:
        loss_smooth = tot[4] / (DT ** 4) / (B * (T - 2) * 3.0) * LAMBDA_SMOOTH
        losses["loss_smooth"] = loss_smooth
        total = total + loss_smooth
    losses["loss_total"] = total
    return losses


# ---- pure-JAX reference mirroring the PyTorch forward ----------------------
def reference_loss(pt, pv, pr, gt, gv, m):
    mb = m.astype(bool)
    losses = {}
    losses["loss_trajectory"] = jnp.mean((pt[mb] - gt[mb]) ** 2)
    losses["loss_velocity"] = jnp.mean((pv[mb] - gv[mb]) ** 2)
    B, T, _ = pt.shape
    phys = jnp.float32(0.0)
    for t in range(T - 1):
        pos_t, vel_t, rot_t = pt[:, t], pv[:, t], pr[:, t]
        pos_tp1, vel_tp1 = pt[:, t + 1], pv[:, t + 1]
        speed = jnp.linalg.norm(vel_t, axis=-1, keepdims=True)
        drag = -0.5 * AIR_DENSITY * DRAG_COEFFICIENT * speed * vel_t
        magnus = 0.5 * AIR_DENSITY * LIFT_COEFFICIENT * jnp.cross(rot_t, vel_t)
        grav = jnp.concatenate(
            [jnp.zeros((B, 2), jnp.float32), -GRAVITY * jnp.ones((B, 1), jnp.float32)], -1)
        acc = (drag + magnus + grav) / MASS
        ppos = pos_t + vel_t * DT + 0.5 * acc * DT ** 2
        pvel = vel_t + acc * DT
        phys = phys + jnp.mean((pos_tp1 - ppos) ** 2) + jnp.mean((vel_tp1 - pvel) ** 2)
    losses["loss_physics"] = phys * LAMBDA_PHYSICS
    acc_pred = (pv[:, 2:] - 2 * pv[:, 1:-1] + pv[:, :-2]) / DT ** 2
    losses["loss_smooth"] = jnp.mean(jnp.square(acc_pred)) * LAMBDA_SMOOTH
    losses["loss_total"] = sum(losses.values())
    return losses


if __name__ == "__main__":
    B, T = 2, 8
    key = jax.random.PRNGKey(0)
    k1, k2, k3, k4, k5, k6 = jax.random.split(key, 6)
    pred_traj = jax.random.normal(k1, (B, T, 3), jnp.float32)
    pred_vel = jax.random.normal(k2, (B, T, 3), jnp.float32)
    pred_rot = jax.random.normal(k3, (B, T, 3), jnp.float32)
    gt_traj = jax.random.normal(k4, (B, T, 3), jnp.float32)
    gt_vel = jax.random.normal(k5, (B, T, 3), jnp.float32)
    masks = (jax.random.uniform(k6, (B, T)) > 0.2).at[0, 0].set(True)

    losses = physics_informed_loss(pred_traj, pred_vel, pred_rot, gt_traj, gt_vel, masks)
    losses = {k: jax.block_until_ready(v) for k, v in losses.items()}

    ref = reference_loss(pred_traj, pred_vel, pred_rot, gt_traj, gt_vel, masks)
    for k in ref:
        assert jnp.allclose(losses[k], ref[k], rtol=2e-3, atol=1e-5), (k, losses[k], ref[k])

    print("KERNEL_OK")
</pallas_src>

<mosaic_0001>
module attributes {stable_mosaic.version = 11 : i64} {
  func.func @kernel(%arg0: i32, %arg1: memref<3x2x128xf32, #tpu.memory_space<vmem>>, %arg2: memref<3x2x128xf32, #tpu.memory_space<vmem>>, %arg3: memref<3x2x128xf32, #tpu.memory_space<vmem>>, %arg4: memref<3x2x128xf32, #tpu.memory_space<vmem>>, %arg5: memref<3x2x128xf32, #tpu.memory_space<vmem>>, %arg6: memref<2x128xf32, #tpu.memory_space<vmem>>, %arg7: memref<1x8x128xf32, #tpu.memory_space<vmem>>) attributes {dimension_semantics = [#tpu.dimension_semantics<parallel>], iteration_bounds = array<i64: 1>, scalar_prefetch = 0 : i64, scratch_operands = 0 : i64, tpu.core_type = #tpu.core_type<tc>, window_params = [{transform_indices = @transform_0, window_bounds = array<i64: 3, 2, 128>}, {transform_indices = @transform_1, window_bounds = array<i64: 3, 2, 128>}, {transform_indices = @transform_2, window_bounds = array<i64: 3, 2, 128>}, {transform_indices = @transform_3, window_bounds = array<i64: 3, 2, 128>}, {transform_indices = @transform_4, window_bounds = array<i64: 3, 2, 128>}, {transform_indices = @transform_5, window_bounds = array<i64: 2, 128>}, {transform_indices = @transform_6, window_bounds = array<i64: 1, 8, 128>}]} {
    %c0 = arith.constant 0 : index
    %c0_0 = arith.constant 0 : index
    %c0_1 = arith.constant 0 : index
    %0 = vector.load %arg1[%c0, %c0_0, %c0_1] : memref<3x2x128xf32, #tpu.memory_space<vmem>>, vector<1x2x128xf32>
    %1 = vector.shape_cast %0 : vector<1x2x128xf32> to vector<2x128xf32>
    %c1 = arith.constant 1 : index
    %c0_2 = arith.constant 0 : index
    %c0_3 = arith.constant 0 : index
    %2 = vector.load %arg1[%c1, %c0_2, %c0_3] : memref<3x2x128xf32, #tpu.memory_space<vmem>>, vector<1x2x128xf32>
    %3 = vector.shape_cast %2 : vector<1x2x128xf32> to vector<2x128xf32>
    %c2 = arith.constant 2 : index
    %c0_4 = arith.constant 0 : index
    %c0_5 = arith.constant 0 : index
    %4 = vector.load %arg1[%c2, %c0_4, %c0_5] : memref<3x2x128xf32, #tpu.memory_space<vmem>>, vector<1x2x128xf32>
    %5 = vector.shape_cast %4 : vector<1x2x128xf32> to vector<2x128xf32>
    %c0_6 = arith.constant 0 : index
    %c0_7 = arith.constant 0 : index
    %c0_8 = arith.constant 0 : index
    %6 = vector.load %arg2[%c0_6, %c0_7, %c0_8] : memref<3x2x128xf32, #tpu.memory_space<vmem>>, vector<1x2x128xf32>
    %7 = vector.shape_cast %6 : vector<1x2x128xf32> to vector<2x128xf32>
    %c1_9 = arith.constant 1 : index
    %c0_10 = arith.constant 0 : index
    %c0_11 = arith.constant 0 : index
    %8 = vector.load %arg2[%c1_9, %c0_10, %c0_11] : memref<3x2x128xf32, #tpu.memory_space<vmem>>, vector<1x2x128xf32>
    %9 = vector.shape_cast %8 : vector<1x2x128xf32> to vector<2x128xf32>
    %c2_12 = arith.constant 2 : index
    %c0_13 = arith.constant 0 : index
    %c0_14 = arith.constant 0 : index
    %10 = vector.load %arg2[%c2_12, %c0_13, %c0_14] : memref<3x2x128xf32, #tpu.memory_space<vmem>>, vector<1x2x128xf32>
    %11 = vector.shape_cast %10 : vector<1x2x128xf32> to vector<2x128xf32>
    %c0_15 = arith.constant 0 : index
    %c0_16 = arith.constant 0 : index
    %c0_17 = arith.constant 0 : index
    %12 = vector.load %arg3[%c0_15, %c0_16, %c0_17] : memref<3x2x128xf32, #tpu.memory_space<vmem>>, vector<1x2x128xf32>
    %13 = vector.shape_cast %12 : vector<1x2x128xf32> to vector<2x128xf32>
    %c1_18 = arith.constant 1 : index
    %c0_19 = arith.constant 0 : index
    %c0_20 = arith.constant 0 : index
    %14 = vector.load %arg3[%c1_18, %c0_19, %c0_20] : memref<3x2x128xf32, #tpu.memory_space<vmem>>, vector<1x2x128xf32>
    %15 = vector.shape_cast %14 : vector<1x2x128xf32> to vector<2x128xf32>
    %c2_21 = arith.constant 2 : index
    %c0_22 = arith.constant 0 : index
    %c0_23 = arith.constant 0 : index
    %16 = vector.load %arg3[%c2_21, %c0_22, %c0_23] : memref<3x2x128xf32, #tpu.memory_space<vmem>>, vector<1x2x128xf32>
    %17 = vector.shape_cast %16 : vector<1x2x128xf32> to vector<2x128xf32>
    %c0_24 = arith.constant 0 : index
    %c0_25 = arith.constant 0 : index
    %c0_26 = arith.constant 0 : index
    %18 = vector.load %arg4[%c0_24, %c0_25, %c0_26] : memref<3x2x128xf32, #tpu.memory_space<vmem>>, vector<1x2x128xf32>
    %19 = vector.shape_cast %18 : vector<1x2x128xf32> to vector<2x128xf32>
    %c1_27 = arith.constant 1 : index
    %c0_28 = arith.constant 0 : index
    %c0_29 = arith.constant 0 : index
    %20 = vector.load %arg4[%c1_27, %c0_28, %c0_29] : memref<3x2x128xf32, #tpu.memory_space<vmem>>, vector<1x2x128xf32>
    %21 = vector.shape_cast %20 : vector<1x2x128xf32> to vector<2x128xf32>
    %c2_30 = arith.constant 2 : index
    %c0_31 = arith.constant 0 : index
    %c0_32 = arith.constant 0 : index
    %22 = vector.load %arg4[%c2_30, %c0_31, %c0_32] : memref<3x2x128xf32, #tpu.memory_space<vmem>>, vector<1x2x128xf32>
    %23 = vector.shape_cast %22 : vector<1x2x128xf32> to vector<2x128xf32>
    %c0_33 = arith.constant 0 : index
    %c0_34 = arith.constant 0 : index
    %c0_35 = arith.constant 0 : index
    %24 = vector.load %arg5[%c0_33, %c0_34, %c0_35] : memref<3x2x128xf32, #tpu.memory_space<vmem>>, vector<1x2x128xf32>
    %25 = vector.shape_cast %24 : vector<1x2x128xf32> to vector<2x128xf32>
    %c1_36 = arith.constant 1 : index
    %c0_37 = arith.constant 0 : index
    %c0_38 = arith.constant 0 : index
    %26 = vector.load %arg5[%c1_36, %c0_37, %c0_38] : memref<3x2x128xf32, #tpu.memory_space<vmem>>, vector<1x2x128xf32>
    %27 = vector.shape_cast %26 : vector<1x2x128xf32> to vector<2x128xf32>
    %c2_39 = arith.constant 2 : index
    %c0_40 = arith.constant 0 : index
    %c0_41 = arith.constant 0 : index
    %28 = vector.load %arg5[%c2_39, %c0_40, %c0_41] : memref<3x2x128xf32, #tpu.memory_space<vmem>>, vector<1x2x128xf32>
    %29 = vector.shape_cast %28 : vector<1x2x128xf32> to vector<2x128xf32>
    %c0_42 = arith.constant 0 : index
    %c0_43 = arith.constant 0 : index
    %30 = vector.load %arg6[%c0_42, %c0_43] : memref<2x128xf32, #tpu.memory_space<vmem>>, vector<2x128xf32>
    %31 = arith.subf %1, %19 : vector<2x128xf32>
    %32 = arith.mulf %31, %31 : vector<2x128xf32>
    %33 = arith.subf %3, %21 : vector<2x128xf32>
    %34 = arith.mulf %33, %33 : vector<2x128xf32>
    %35 = arith.addf %32, %34 : vector<2x128xf32>
    %36 = arith.subf %5, %23 : vector<2x128xf32>
    %37 = arith.mulf %36, %36 : vector<2x128xf32>
    %38 = arith.addf %35, %37 : vector<2x128xf32>
    %39 = arith.mulf %38, %30 : vector<2x128xf32>
    %40 = vector.shape_cast %39 : vector<2x128xf32> to vector<1x2x128xf32>
    %cst = arith.constant dense<0.000000e+00> : vector<1xf32>
    %41 = vector.multi_reduction <add>, %40, %cst [1, 2] : vector<1x2x128xf32> to vector<1xf32>
    %42 = vector.shape_cast %41 : vector<1xf32> to vector<1x1x1xf32>
    %43 = vector.extract %42[0, 0, 0] : f32 from vector<1x1x1xf32>
    %44 = arith.subf %7, %25 : vector<2x128xf32>
    %45 = arith.mulf %44, %44 : vector<2x128xf32>
    %46 = arith.subf %9, %27 : vector<2x128xf32>
    %47 = arith.mulf %46, %46 : vector<2x128xf32>
    %48 = arith.addf %45, %47 : vector<2x128xf32>
    %49 = arith.subf %11, %29 : vector<2x128xf32>
    %50 = arith.mulf %49, %49 : vector<2x128xf32>
    %51 = arith.addf %48, %50 : vector<2x128xf32>
    %52 = arith.mulf %51, %30 : vector<2x128xf32>
    %53 = vector.shape_cast %52 : vector<2x128xf32> to vector<1x2x128xf32>
    %cst_44 = arith.constant dense<0.000000e+00> : vector<1xf32>
    %54 = vector.multi_reduction <add>, %53, %cst_44 [1, 2] : vector<1x2x128xf32> to vector<1xf32>
    %55 = vector.shape_cast %54 : vector<1xf32> to vector<1x1x1xf32>
    %56 = vector.extract %55[0, 0, 0] : f32 from vector<1x1x1xf32>
    %57 = vector.shape_cast %30 : vector<2x128xf32> to vector<1x2x128xf32>
    %cst_45 = arith.constant dense<0.000000e+00> : vector<1xf32>
    %58 = vector.multi_reduction <add>, %57, %cst_45 [1, 2] : vector<1x2x128xf32> to vector<1xf32>
    %59 = vector.shape_cast %58 : vector<1xf32> to vector<1x1x1xf32>
    %60 = vector.extract %59[0, 0, 0] : f32 from vector<1x1x1xf32>
    %61 = tpu.iota {dimensions = array<i32: 1>} : vector<2x128xi32>
    %c7_i32 = arith.constant 7 : i32
    %62 = vector.broadcast %c7_i32 : i32 to vector<2x128xi32>
    %63 = arith.cmpi slt, %61, %62 : vector<2x128xi32>
    %c6_i32 = arith.constant 6 : i32
    %64 = vector.broadcast %c6_i32 : i32 to vector<2x128xi32>
    %65 = arith.cmpi slt, %61, %64 : vector<2x128xi32>
    %66 = arith.extui %63 : vector<2x128xi1> to vector<2x128xi32>
    %67 = arith.sitofp %66 : vector<2x128xi32> to vector<2x128xf32>
    %68 = arith.extui %65 : vector<2x128xi1> to vector<2x128xi32>
    %69 = arith.sitofp %68 : vector<2x128xi32> to vector<2x128xf32>
    %c127_i32 = arith.constant 127 : i32
    %70 = tpu.dynamic_rotate %1 by %c127_i32 dim 1 : vector<2x128xf32>, i32 -> vector<2x128xf32>
    %c127_i32_46 = arith.constant 127 : i32
    %71 = tpu.dynamic_rotate %3 by %c127_i32_46 dim 1 : vector<2x128xf32>, i32 -> vector<2x128xf32>
    %c127_i32_47 = arith.constant 127 : i32
    %72 = tpu.dynamic_rotate %5 by %c127_i32_47 dim 1 : vector<2x128xf32>, i32 -> vector<2x128xf32>
    %c127_i32_48 = arith.constant 127 : i32
    %73 = tpu.dynamic_rotate %7 by %c127_i32_48 dim 1 : vector<2x128xf32>, i32 -> vector<2x128xf32>
    %c127_i32_49 = arith.constant 127 : i32
    %74 = tpu.dynamic_rotate %9 by %c127_i32_49 dim 1 : vector<2x128xf32>, i32 -> vector<2x128xf32>
    %c127_i32_50 = arith.constant 127 : i32
    %75 = tpu.dynamic_rotate %11 by %c127_i32_50 dim 1 : vector<2x128xf32>, i32 -> vector<2x128xf32>
    %c126_i32 = arith.constant 126 : i32
    %76 = tpu.dynamic_rotate %7 by %c126_i32 dim 1 : vector<2x128xf32>, i32 -> vector<2x128xf32>
    %c126_i32_51 = arith.constant 126 : i32
    %77 = tpu.dynamic_rotate %9 by %c126_i32_51 dim 1 : vector<2x128xf32>, i32 -> vector<2x128xf32>
    %c126_i32_52 = arith.constant 126 : i32
    %78 = tpu.dynamic_rotate %11 by %c126_i32_52 dim 1 : vector<2x128xf32>, i32 -> vector<2x128xf32>
    %79 = arith.mulf %7, %7 : vector<2x128xf32>
    %80 = arith.mulf %9, %9 : vector<2x128xf32>
    %81 = arith.addf %79, %80 : vector<2x128xf32>
    %82 = arith.mulf %11, %11 : vector<2x128xf32>
    %83 = arith.addf %81, %82 : vector<2x128xf32>
    %84 = math.sqrt %83 : vector<2x128xf32>
    %cst_53 = arith.constant -3.675000e-01 : f32
    %85 = vector.broadcast %cst_53 : f32 to vector<2x128xf32>
    %86 = arith.mulf %85, %84 : vector<2x128xf32>
    %87 = arith.mulf %86, %7 : vector<2x128xf32>
    %88 = arith.mulf %15, %11 : vector<2x128xf32>
    %89 = arith.mulf %17, %9 : vector<2x128xf32>
    %90 = arith.subf %88, %89 : vector<2x128xf32>
    %cst_54 = arith.constant 2.450000e-01 : f32
    %91 = vector.broadcast %cst_54 : f32 to vector<2x128xf32>
    %92 = arith.mulf %91, %90 : vector<2x128xf32>
    %93 = arith.addf %87, %92 : vector<2x128xf32>
    %cst_55 = arith.constant -3.675000e-01 : f32
    %94 = vector.broadcast %cst_55 : f32 to vector<2x128xf32>
    %95 = arith.mulf %94, %84 : vector<2x128xf32>
    %96 = arith.mulf %95, %9 : vector<2x128xf32>
    %97 = arith.mulf %17, %7 : vector<2x128xf32>
    %98 = arith.mulf %13, %11 : vector<2x128xf32>
    %99 = arith.subf %97, %98 : vector<2x128xf32>
    %cst_56 = arith.constant 2.450000e-01 : f32
    %100 = vector.broadcast %cst_56 : f32 to vector<2x128xf32>
    %101 = arith.mulf %100, %99 : vector<2x128xf32>
    %102 = arith.addf %96, %101 : vector<2x128xf32>
    %cst_57 = arith.constant -3.675000e-01 : f32
    %103 = vector.broadcast %cst_57 : f32 to vector<2x128xf32>
    %104 = arith.mulf %103, %84 : vector<2x128xf32>
    %105 = arith.mulf %104, %11 : vector<2x128xf32>
    %106 = arith.mulf %13, %9 : vector<2x128xf32>
    %107 = arith.mulf %15, %7 : vector<2x128xf32>
    %108 = arith.subf %106, %107 : vector<2x128xf32>
    %cst_58 = arith.constant 2.450000e-01 : f32
    %109 = vector.broadcast %cst_58 : f32 to vector<2x128xf32>
    %110 = arith.mulf %109, %108 : vector<2x128xf32>
    %111 = arith.addf %105, %110 : vector<2x128xf32>
    %cst_59 = arith.constant 9.810000e+00 : f32
    %112 = vector.broadcast %cst_59 : f32 to vector<2x128xf32>
    %113 = arith.subf %111, %112 : vector<2x128xf32>
    %cst_60 = arith.constant 0.0333333351 : f32
    %114 = vector.broadcast %cst_60 : f32 to vector<2x128xf32>
    %115 = arith.mulf %7, %114 : vector<2x128xf32>
    %116 = arith.addf %1, %115 : vector<2x128xf32>
    %cst_61 = arith.constant 0.111111112 : f32
    %117 = vector.broadcast %cst_61 : f32 to vector<2x128xf32>
    %118 = arith.mulf %93, %117 : vector<2x128xf32>
    %119 = arith.addf %116, %118 : vector<2x128xf32>
    %120 = arith.subf %70, %119 : vector<2x128xf32>
    %121 = arith.mulf %120, %120 : vector<2x128xf32>
    %cst_62 = arith.constant 0.0333333351 : f32
    %122 = vector.broadcast %cst_62 : f32 to vector<2x128xf32>
    %123 = arith.mulf %9, %122 : vector<2x128xf32>
    %124 = arith.addf %3, %123 : vector<2x128xf32>
    %cst_63 = arith.constant 0.111111112 : f32
    %125 = vector.broadcast %cst_63 : f32 to vector<2x128xf32>
    %126 = arith.mulf %102, %125 : vector<2x128xf32>
    %127 = arith.addf %124, %126 : vector<2x128xf32>
    %128 = arith.subf %71, %127 : vector<2x128xf32>
    %129 = arith.mulf %128, %128 : vector<2x128xf32>
    %130 = arith.addf %121, %129 : vector<2x128xf32>
    %cst_64 = arith.constant 0.0333333351 : f32
    %131 = vector.broadcast %cst_64 : f32 to vector<2x128xf32>
    %132 = arith.mulf %11, %131 : vector<2x128xf32>
    %133 = arith.addf %5, %132 : vector<2x128xf32>
    %cst_65 = arith.constant 0.111111112 : f32
    %134 = vector.broadcast %cst_65 : f32 to vector<2x128xf32>
    %135 = arith.mulf %113, %134 : vector<2x128xf32>
    %136 = arith.addf %133, %135 : vector<2x128xf32>
    %137 = arith.subf %72, %136 : vector<2x128xf32>
    %138 = arith.mulf %137, %137 : vector<2x128xf32>
    %139 = arith.addf %130, %138 : vector<2x128xf32>
    %cst_66 = arith.constant 6.66666651 : f32
    %140 = vector.broadcast %cst_66 : f32 to vector<2x128xf32>
    %141 = arith.mulf %93, %140 : vector<2x128xf32>
    %142 = arith.addf %7, %141 : vector<2x128xf32>
    %143 = arith.subf %73, %142 : vector<2x128xf32>
    %144 = arith.mulf %143, %143 : vector<2x128xf32>
    %cst_67 = arith.constant 6.66666651 : f32
    %145 = vector.broadcast %cst_67 : f32 to vector<2x128xf32>
    %146 = arith.mulf %102, %145 : vector<2x128xf32>
    %147 = arith.addf %9, %146 : vector<2x128xf32>
    %148 = arith.subf %74, %147 : vector<2x128xf32>
    %149 = arith.mulf %148, %148 : vector<2x128xf32>
    %150 = arith.addf %144, %149 : vector<2x128xf32>
    %cst_68 = arith.constant 6.66666651 : f32
    %151 = vector.broadcast %cst_68 : f32 to vector<2x128xf32>
    %152 = arith.mulf %113, %151 : vector<2x128xf32>
    %153 = arith.addf %11, %152 : vector<2x128xf32>
    %154 = arith.subf %75, %153 : vector<2x128xf32>
    %155 = arith.mulf %154, %154 : vector<2x128xf32>
    %156 = arith.addf %150, %155 : vector<2x128xf32>
    %157 = arith.addf %139, %156 : vector<2x128xf32>
    %158 = arith.mulf %157, %67 : vector<2x128xf32>
    %159 = vector.shape_cast %158 : vector<2x128xf32> to vector<1x2x128xf32>
    %cst_69 = arith.constant dense<0.000000e+00> : vector<1xf32>
    %160 = vector.multi_reduction <add>, %159, %cst_69 [1, 2] : vector<1x2x128xf32> to vector<1xf32>
    %161 = vector.shape_cast %160 : vector<1xf32> to vector<1x1x1xf32>
    %162 = vector.extract %161[0, 0, 0] : f32 from vector<1x1x1xf32>
    %cst_70 = arith.constant 2.000000e+00 : f32
    %163 = vector.broadcast %cst_70 : f32 to vector<2x128xf32>
    %164 = arith.mulf %163, %73 : vector<2x128xf32>
    %165 = arith.subf %76, %164 : vector<2x128xf32>
    %166 = arith.addf %165, %7 : vector<2x128xf32>
    %cst_71 = arith.constant 2.000000e+00 : f32
    %167 = vector.broadcast %cst_71 : f32 to vector<2x128xf32>
    %168 = arith.mulf %167, %74 : vector<2x128xf32>
    %169 = arith.subf %77, %168 : vector<2x128xf32>
    %170 = arith.addf %169, %9 : vector<2x128xf32>
    %cst_72 = arith.constant 2.000000e+00 : f32
    %171 = vector.broadcast %cst_72 : f32 to vector<2x128xf32>
    %172 = arith.mulf %171, %75 : vector<2x128xf32>
    %173 = arith.subf %78, %172 : vector<2x128xf32>
    %174 = arith.addf %173, %11 : vector<2x128xf32>
    %175 = arith.mulf %166, %166 : vector<2x128xf32>
    %176 = arith.mulf %170, %170 : vector<2x128xf32>
    %177 = arith.addf %175, %176 : vector<2x128xf32>
    %178 = arith.mulf %174, %174 : vector<2x128xf32>
    %179 = arith.addf %177, %178 : vector<2x128xf32>
    %180 = arith.mulf %179, %69 : vector<2x128xf32>
    %181 = vector.shape_cast %180 : vector<2x128xf32> to vector<1x2x128xf32>
    %cst_73 = arith.constant dense<0.000000e+00> : vector<1xf32>
    %182 = vector.multi_reduction <add>, %181, %cst_73 [1, 2] : vector<1x2x128xf32> to vector<1xf32>
    %183 = vector.shape_cast %182 : vector<1xf32> to vector<1x1x1xf32>
    %184 = vector.extract %183[0, 0, 0] : f32 from vector<1x1x1xf32>
    %185 = tpu.iota {dimensions = array<i32: 1>} : vector<1x8x128xi32>
    %c0_i32 = arith.constant 0 : i32
    %186 = vector.broadcast %c0_i32 : i32 to vector<1x8x128xi32>
    %187 = arith.cmpi eq, %185, %186 : vector<1x8x128xi32>
    %cst_74 = arith.constant 0.000000e+00 : f32
    %188 = vector.broadcast %43 : f32 to vector<1x8x128xf32>
    %189 = vector.broadcast %cst_74 : f32 to vector<1x8x128xf32>
    %190 = arith.select %187, %188, %189 : vector<1x8x128xi1>, vector<1x8x128xf32>
    %c1_i32 = arith.constant 1 : i32
    %191 = vector.broadcast %c1_i32 : i32 to vector<1x8x128xi32>
    %192 = arith.cmpi eq, %185, %191 : vector<1x8x128xi32>
    %cst_75 = arith.constant 0.000000e+00 : f32
    %193 = vector.broadcast %56 : f32 to vector<1x8x128xf32>
    %194 = vector.broadcast %cst_75 : f32 to vector<1x8x128xf32>
    %195 = arith.select %192, %193, %194 : vector<1x8x128xi1>, vector<1x8x128xf32>
    %196 = arith.addf %190, %195 : vector<1x8x128xf32>
    %c2_i32 = arith.constant 2 : i32
    %197 = vector.broadcast %c2_i32 : i32 to vector<1x8x128xi32>
    %198 = arith.cmpi eq, %185, %197 : vector<1x8x128xi32>
    %cst_76 = arith.constant 0.000000e+00 : f32
    %199 = vector.broadcast %60 : f32 to vector<1x8x128xf32>
    %200 = vector.broadcast %cst_76 : f32 to vector<1x8x128xf32>
    %201 = arith.select %198, %199, %200 : vector<1x8x128xi1>, vector<1x8x128xf32>
    %202 = arith.addf %196, %201 : vector<1x8x128xf32>
    %c3_i32 = arith.constant 3 : i32
    %203 = vector.broadcast %c3_i32 : i32 to vector<1x8x128xi32>
    %204 = arith.cmpi eq, %185, %203 : vector<1x8x128xi32>
    %cst_77 = arith.constant 0.000000e+00 : f32
    %205 = vector.broadcast %162 : f32 to vector<1x8x128xf32>
    %206 = vector.broadcast %cst_77 : f32 to vector<1x8x128xf32>
    %207 = arith.select %204, %205, %206 : vector<1x8x128xi1>, vector<1x8x128xf32>
    %208 = arith.addf %202, %207 : vector<1x8x128xf32>
    %c4_i32 = arith.constant 4 : i32
    %209 = vector.broadcast %c4_i32 : i32 to vector<1x8x128xi32>
    %210 = arith.cmpi eq, %185, %209 : vector<1x8x128xi32>
    %cst_78 = arith.constant 0.000000e+00 : f32
    %211 = vector.broadcast %184 : f32 to vector<1x8x128xf32>
    %212 = vector.broadcast %cst_78 : f32 to vector<1x8x128xf32>
    %213 = arith.select %210, %211, %212 : vector<1x8x128xi1>, vector<1x8x128xf32>
    %214 = arith.addf %208, %213 : vector<1x8x128xf32>
    %c0_79 = arith.constant 0 : index
    %c0_80 = arith.constant 0 : index
    %c0_81 = arith.constant 0 : index
    %215 = vector.load %arg7[%c0_79, %c0_80, %c0_81] : memref<1x8x128xf32, #tpu.memory_space<vmem>>, vector<1x8x128xf32>
    tpu.vector_store %arg7[%c0_79, %c0_80, %c0_81], %214 {strides = array<i32>} : memref<1x8x128xf32, #tpu.memory_space<vmem>>, vector<1x8x128xf32>,
    return
  }
  func.func @transform_0(%arg0: i32) -> (i32, i32, i32) {
    %c0_i32 = arith.constant 0 : i32
    %c0_i32_0 = arith.constant 0 : i32
    %c0_i32_1 = arith.constant 0 : i32
    return %c0_i32, %arg0, %c0_i32_0 : i32, i32, i32
  }
  func.func @transform_1(%arg0: i32) -> (i32, i32, i32) {
    %c0_i32 = arith.constant 0 : i32
    %c0_i32_0 = arith.constant 0 : i32
    %c0_i32_1 = arith.constant 0 : i32
    return %c0_i32, %arg0, %c0_i32_0 : i32, i32, i32
  }
  func.func @transform_2(%arg0: i32) -> (i32, i32, i32) {
    %c0_i32 = arith.constant 0 : i32
    %c0_i32_0 = arith.constant 0 : i32
    %c0_i32_1 = arith.constant 0 : i32
    return %c0_i32, %arg0, %c0_i32_0 : i32, i32, i32
  }
  func.func @transform_3(%arg0: i32) -> (i32, i32, i32) {
    %c0_i32 = arith.constant 0 : i32
    %c0_i32_0 = arith.constant 0 : i32
    %c0_i32_1 = arith.constant 0 : i32
    return %c0_i32, %arg0, %c0_i32_0 : i32, i32, i32
  }
  func.func @transform_4(%arg0: i32) -> (i32, i32, i32) {
    %c0_i32 = arith.constant 0 : i32
    %c0_i32_0 = arith.constant 0 : i32
    %c0_i32_1 = arith.constant 0 : i32
    return %c0_i32, %arg0, %c0_i32_0 : i32, i32, i32
  }
  func.func @transform_5(%arg0: i32) -> (i32, i32) {
    %c0_i32 = arith.constant 0 : i32
    %c0_i32_0 = arith.constant 0 : i32
    return %arg0, %c0_i32 : i32, i32
  }
  func.func @transform_6(%arg0: i32) -> (i32, i32, i32) {
    %c0_i32 = arith.constant 0 : i32
    %c0_i32_0 = arith.constant 0 : i32
    %c0_i32_1 = arith.constant 0 : i32
    return %arg0, %c0_i32, %c0_i32_0 : i32, i32, i32
  }
}

</mosaic_0001>

<llo_original>
// kernel: tpu_custom_call.1
$region0: #{tpu_custom_call.1}
  #allocation0 [shape = 'u32[]', space=smem, size = 0x4, offset = 0x4, fixed_abs, tag = 'smem constant byte address 0x4 - core index']
  #allocation1 [shape = 'u32[144,128]{1,0:T(1,128)}', space=vmem, size = 0x12000, scoped, tag = 'internal scratch']
  %s0 = inlined_call_operand.hbm [shape: f32[3,2,128], index: 0, kind: input, shape index: {}]
  %s1 = inlined_call_operand.hbm [shape: f32[3,2,128], index: 1, kind: input, shape index: {}]
  %s2 = inlined_call_operand.vmem [shape: f32[3,2,128], index: 2, kind: input, shape index: {}]
  %s3 = inlined_call_operand.hbm [shape: f32[3,2,128], index: 3, kind: input, shape index: {}]
  %s4 = inlined_call_operand.vmem [shape: f32[3,2,128], index: 4, kind: input, shape index: {}]
  %s5 = inlined_call_operand.vmem [shape: f32[2,128], index: 5, kind: input, shape index: {}]
  %s6 = inlined_call_operand.hbm [shape: f32[1,8,128], index: 6, kind: output, shape index: {}]
  %s7 = sld [smem:[#allocation0]]
  $region46: #{tpu_custom_call.1} parent=0
    _
  %s9 = ssub.s32 1, %s7
  %s10 = scalar_select 0, %s9, %s7
  $region1: #{tpu_custom_call.1} parent=0
    #allocation2 [shape = 'u8[3072]{0}', space=vmem, size = 0xc00, scoped, tag = 'input window, operand 0, single buffered']
    #allocation3 [shape = 's32[1]{0}', space=sflag, size = 0x4, scoped, tag = 'scoped memory for tpu_custom_call.1']
    #allocation4 [shape = 's32[1]{0}', space=sflag, size = 0x4, scoped, tag = 'scoped memory for tpu_custom_call.1']
    #allocation5 [shape = 'u8[3072]{0}', space=vmem, size = 0xc00, scoped, tag = 'input window, operand 1, single buffered']
    #allocation6 [shape = 's32[1]{0}', space=sflag, size = 0x4, scoped, tag = 'scoped memory for tpu_custom_call.1']
    #allocation7 [shape = 'u8[3072]{0}', space=vmem, size = 0xc00, scoped, tag = 'input window, operand 3, single buffered']
    #allocation8 [shape = 'u8[4096]{0}', space=vmem, size = 0x1000, scoped, tag = 'output window, operand 0, single buffered']
    %11 = vsyncpa [#allocation3], 0
    %12 = vsyncpa [#allocation6], 0
    %13 = vsyncpa [#allocation4], 0
    // Predicated region
    $region2: #{tpu_custom_call.1} parent=1 // pred_check
      _
    $region3: #{tpu_custom_call.1} parent=1 // pred_check_branch
      %15 = sbr.rel (0) target = $region5
    $region4: #{tpu_custom_call.1} parent=1 // pred_region
      %s17 = ssub.s32 96, 96
      %18 = vsyncadd [#allocation3], %s17
      %s19 = sshll.u32 [#allocation2], 4
      %s20 = int_to_ptr.vmem [resolvable:$true] %s19
      %25 = dma.hbm_to_vmem [thread:$0]  %s0, 96, %s20, [#allocation3], 32, 32, 2
    $region5: #{tpu_custom_call.1} parent=1 // pred_fallthru
      _
    // Predicated region
    $region6: #{tpu_custom_call.1} parent=1 // pred_check
      _
    $region7: #{tpu_custom_call.1} parent=1 // pred_check_branch
      %27 = sbr.rel (0) target = $region9
    $region8: #{tpu_custom_call.1} parent=1 // pred_region
      %s29 = ssub.s32 96, 96
      %30 = vsyncadd [#allocation6], %s29
      %s31 = sshll.u32 [#allocation5], 4
      %s32 = int_to_ptr.vmem [resolvable:$true] %s31
      %37 = dma.hbm_to_vmem [thread:$0]  %s1, 96, %s32, [#allocation6], 32, 32, 2
    $region9: #{tpu_custom_call.1} parent=1 // pred_fallthru
      _
    // Predicated region
    $region10: #{tpu_custom_call.1} parent=1 // pred_check
      _
    $region11: #{tpu_custom_call.1} parent=1 // pred_check_branch
      %39 = sbr.rel (0) target = $region13
    $region12: #{tpu_custom_call.1} parent=1 // pred_region
      _
    $region13: #{tpu_custom_call.1} parent=1 // pred_fallthru
      _
    // Predicated region
    $region14: #{tpu_custom_call.1} parent=1 // pred_check
      _
    $region15: #{tpu_custom_call.1} parent=1 // pred_check_branch
      %41 = sbr.rel (0) target = $region17
    $region16: #{tpu_custom_call.1} parent=1 // pred_region
      %s43 = ssub.s32 96, 96
      %44 = vsyncadd [#allocation6], %s43
      %s45 = sshll.u32 [#allocation7], 4
      %s46 = int_to_ptr.vmem [resolvable:$true] %s45
      %51 = dma.hbm_to_vmem [thread:$0]  %s3, 96, %s46, [#allocation6], 32, 32, 2
    $region17: #{tpu_custom_call.1} parent=1 // pred_fallthru
      _
    // Predicated region
    $region18: #{tpu_custom_call.1} parent=1 // pred_check
      _
    $region19: #{tpu_custom_call.1} parent=1 // pred_check_branch
      %53 = sbr.rel (0) target = $region21
    $region20: #{tpu_custom_call.1} parent=1 // pred_region
      _
    $region21: #{tpu_custom_call.1} parent=1 // pred_fallthru
      _
    // Predicated region
    $region22: #{tpu_custom_call.1} parent=1 // pred_check
      _
    $region23: #{tpu_custom_call.1} parent=1 // pred_check_branch
      %55 = sbr.rel (0) target = $region25
    $region24: #{tpu_custom_call.1} parent=1 // pred_region
      _
    $region25: #{tpu_custom_call.1} parent=1 // pred_fallthru
      _
    // Predicated region
    $region26: #{tpu_custom_call.1} parent=1 // pred_check
      _
    $region27: #{tpu_custom_call.1} parent=1 // pred_check_branch
      %57 = sbr.rel (0) target = $region29
    $region28: #{tpu_custom_call.1} parent=1 // pred_region
      %58 = dma.done [#allocation3], 96
    $region29: #{tpu_custom_call.1} parent=1 // pred_fallthru
      _
    // Predicated region
    $region30: #{tpu_custom_call.1} parent=1 // pred_check
      _
    $region31: #{tpu_custom_call.1} parent=1 // pred_check_branch
      %60 = sbr.rel (0) target = $region33
    $region32: #{tpu_custom_call.1} parent=1 // pred_region
      %61 = dma.done [#allocation6], 96
    $region33: #{tpu_custom_call.1} parent=1 // pred_fallthru
      _
    // Predicated region
    $region34: #{tpu_custom_call.1} parent=1 // pred_check
      _
    $region35: #{tpu_custom_call.1} parent=1 // pred_check_branch
      %63 = sbr.rel (0) target = $region37
    $region36: #{tpu_custom_call.1} parent=1 // pred_region
      %64 = dma.done [#allocation6], 96
    $region37: #{tpu_custom_call.1} parent=1 // pred_fallthru
      _
    %v65 = vld [vmem:[#allocation2] sm:$0x3]
    %s66 = scalar_lea.vmem [#allocation2], 2
    %v67 = vld [vmem:[%s66] sm:$0x3]
    %s68 = scalar_lea.vmem [#allocation2], 4
    %v69 = vld [vmem:[%s68] sm:$0x3]
    %v70 = vld [vmem:[#allocation5] sm:$0x3]
    %s71 = scalar_lea.vmem [#allocation5], 2
    %v72 = vld [vmem:[%s71] sm:$0x3]
    %s73 = scalar_lea.vmem [#allocation5], 4
    %v74 = vld [vmem:[%s73] sm:$0x3]
    %v75 = vld [vmem:[%s2] sm:$0x3]
    %s76 = scalar_lea.vmem %s2, 2
    %v77 = vld [vmem:[%s76] sm:$0x3]
    %s78 = scalar_lea.vmem %s2, 4
    %v79 = vld [vmem:[%s78] sm:$0x3]
    %v80 = vld [vmem:[#allocation7] sm:$0x3]
    %s81 = scalar_lea.vmem [#allocation7], 2
    %v82 = vld [vmem:[%s81] sm:$0x3]
    %s83 = scalar_lea.vmem [#allocation7], 4
    %v84 = vld [vmem:[%s83] sm:$0x3]
    %v85 = vld [vmem:[%s4] sm:$0x3]
    %s86 = scalar_lea.vmem %s4, 2
    %v87 = vld [vmem:[%s86] sm:$0x3]
    %s88 = scalar_lea.vmem %s4, 4
    %v89 = vld [vmem:[%s88] sm:$0x3]
    %v90 = vld [vmem:[%s5] sm:$0x3]
    %v91 = vsub.f32 %v65, %v80
    %v92 = vmul.f32 %v91, %v91
    %v93 = vsub.f32 %v67, %v82
    %v94 = vmul.f32 %v93, %v93
    %v95 = vadd.f32 %v92, %v94
    %v96 = vsub.f32 %v69, %v84
    %v97 = vmul.f32 %v96, %v96
    %v98 = vadd.f32 %v95, %v97
    %v99 = vmul.f32 %v98, %v90
    %vm100 = vcmask 1041408
    %v101 = vsel %vm100, %v99, 0.0
    %102 = vadd.xlane.f32.xlu0 %v101
    %v103 = vpop.xlane.xlu0 %102
    %v104 = vrot.slane %v103, 4
    %v105 = vadd.f32 %v103, %v104
    %v106 = vrot.slane %v105, 2
    %v107 = vadd.f32 %v105, %v106
    %v108 = vrot.slane %v107, 1
    %v109 = vadd.f32 %v107, %v108
    %s110 = vtos %v109
    %v111 = vsub.f32 %v70, %v85
    %v112 = vmul.f32 %v111, %v111
    %v113 = vsub.f32 %v72, %v87
    %v114 = vmul.f32 %v113, %v113
    %v115 = vadd.f32 %v112, %v114
    %v116 = vsub.f32 %v74, %v89
    %v117 = vmul.f32 %v116, %v116
    %v118 = vadd.f32 %v115, %v117
    %v119 = vmul.f32 %v118, %v90
    %v120 = vsel %vm100, %v119, 0.0
    %121 = vadd.xlane.f32.xlu0 %v120
    %v122 = vpop.xlane.xlu0 %121
    %v123 = vrot.slane %v122, 4
    %v124 = vadd.f32 %v122, %v123
    %v125 = vrot.slane %v124, 2
    %v126 = vadd.f32 %v124, %v125
    %v127 = vrot.slane %v126, 1
    %v128 = vadd.f32 %v126, %v127
    %s129 = vtos %v128
    %v130 = vsel %vm100, %v90, 0.0
    %131 = vadd.xlane.f32.xlu0 %v130
    %v132 = vpop.xlane.xlu0 %131
    %v133 = vrot.slane %v132, 4
    %v134 = vadd.f32 %v132, %v133
    %v135 = vrot.slane %v134, 2
    %v136 = vadd.f32 %v134, %v135
    %v137 = vrot.slane %v136, 1
    %v138 = vadd.f32 %v136, %v137
    %s139 = vtos %v138
    %v140 = vlaneseq
    %v141 = vand.u32 %v140, 127
    %vm142 = vcmp.lt.s32.totalorder %v141, 7
    %vm143 = vcmp.lt.s32.totalorder %v141, 6
    %v144 = vsel %vm142, 1, 0
    %v145 = vcvt.s32.f32 %v144
    %v146 = vsel %vm143, 1, 0
    %v147 = vcvt.s32.f32 %v146
    %148 = vrot.lane.b32.xlu0 %v65, 127
    %v149 = vpop.permute.xlu0 %148
    %150 = vrot.lane.b32.xlu0 %v67, 127
    %v151 = vpop.permute.xlu0 %150
    %152 = vrot.lane.b32.xlu0 %v69, 127
    %v153 = vpop.permute.xlu0 %152
    %154 = vrot.lane.b32.xlu0 %v70, 127
    %v155 = vpop.permute.xlu0 %154
    %156 = vrot.lane.b32.xlu0 %v72, 127
    %v157 = vpop.permute.xlu0 %156
    %158 = vrot.lane.b32.xlu0 %v74, 127
    %v159 = vpop.permute.xlu0 %158
    %160 = vrot.lane.b32.xlu0 %v70, 126
    %v161 = vpop.permute.xlu0 %160
    %162 = vrot.lane.b32.xlu0 %v72, 126
    %v163 = vpop.permute.xlu0 %162
    %164 = vrot.lane.b32.xlu0 %v74, 126
    %v165 = vpop.permute.xlu0 %164
    %v166 = vmul.f32 %v70, %v70
    %v167 = vmul.f32 %v72, %v72
    %v168 = vadd.f32 %v166, %v167
    %v169 = vmul.f32 %v74, %v74
    %v170 = vadd.f32 %v168, %v169
    %v171 = vrsqrt.pop %v170
    %v172 = vmul.f32 %v170, %v171
    %vm173 = vcmp.eq.f32.partialorder %v170, inf
    %v174 = vsel %vm173, %v170, %v172
    %vm175 = vcmp.eq.f32.partialorder %v170, 0.0
    %v176 = vand.u32 %v170, 2147483648
    %v177 = vsel %vm175, %v176, %v174
    %v178 = vmul.f32 %v177, -0.3675
    %v179 = vmul.f32 %v178, %v70
    %v180 = vmul.f32 %v77, %v74
    %v181 = vmul.f32 %v79, %v72
    %v182 = vsub.f32 %v180, %v181
    %v183 = vmul.f32 %v182, 0.245
    %v184 = vadd.f32 %v179, %v183
    %v185 = vmul.f32 %v178, %v72
    %v186 = vmul.f32 %v79, %v70
    %v187 = vmul.f32 %v75, %v74
    %v188 = vsub.f32 %v186, %v187
    %v189 = vmul.f32 %v188, 0.245
    %v190 = vadd.f32 %v185, %v189
    %v191 = vmul.f32 %v178, %v74
    %v192 = vmul.f32 %v75, %v72
    %v193 = vmul.f32 %v77, %v70
    %v194 = vsub.f32 %v192, %v193
    %v195 = vmul.f32 %v194, 0.245
    %v196 = vadd.f32 %v191, %v195
    %v197 = vsub.f32 %v196, 9.81
    %v198 = vmul.f32 %v70, 0.033333335
    %v199 = vadd.f32 %v65, %v198
    %v200 = vmul.f32 %v184, 0.11111111
    %v201 = vadd.f32 %v199, %v200
    %v202 = vsub.f32 %v149, %v201
    %v203 = vmul.f32 %v202, %v202
    %v204 = vmul.f32 %v72, 0.033333335
    %v205 = vadd.f32 %v67, %v204
    %v206 = vmul.f32 %v190, 0.11111111
    %v207 = vadd.f32 %v205, %v206
    %v208 = vsub.f32 %v151, %v207
    %v209 = vmul.f32 %v208, %v208
    %v210 = vadd.f32 %v203, %v209
    %v211 = vmul.f32 %v74, 0.033333335
    %v212 = vadd.f32 %v69, %v211
    %v213 = vmul.f32 %v197, 0.11111111
    %v214 = vadd.f32 %v212, %v213
    %v215 = vsub.f32 %v153, %v214
    %v216 = vmul.f32 %v215, %v215
    %v217 = vadd.f32 %v210, %v216
    %v218 = vmul.f32 %v184, 6.6666665
    %v219 = vadd.f32 %v70, %v218
    %v220 = vsub.f32 %v155, %v219
    %v221 = vmul.f32 %v220, %v220
    %v222 = vmul.f32 %v190, 6.6666665
    %v223 = vadd.f32 %v72, %v222
    %v224 = vsub.f32 %v157, %v223
    %v225 = vmul.f32 %v224, %v224
    %v226 = vadd.f32 %v221, %v225
    %v227 = vmul.f32 %v197, 6.6666665
    %v228 = vadd.f32 %v74, %v227
    %v229 = vsub.f32 %v159, %v228
    %v230 = vmul.f32 %v229, %v229
    %v231 = vadd.f32 %v226, %v230
    %v232 = vadd.f32 %v217, %v231
    %v233 = vmul.f32 %v232, %v145
    %v234 = vsel %vm100, %v233, 0.0
    %235 = vadd.xlane.f32.xlu0 %v234
    %v236 = vpop.xlane.xlu0 %235
    %v237 = vrot.slane %v236, 4
    %v238 = vadd.f32 %v236, %v237
    %v239 = vrot.slane %v238, 2
    %v240 = vadd.f32 %v238, %v239
    %v241 = vrot.slane %v240, 1
    %v242 = vadd.f32 %v240, %v241
    %s243 = vtos %v242
    %v244 = vmul.f32 %v155, 2.0
    %v245 = vsub.f32 %v161, %v244
    %v246 = vadd.f32 %v245, %v70
    %v247 = vmul.f32 %v157, 2.0
    %v248 = vsub.f32 %v163, %v247
    %v249 = vadd.f32 %v248, %v72
    %v250 = vmul.f32 %v159, 2.0
    %v251 = vsub.f32 %v165, %v250
    %v252 = vadd.f32 %v251, %v74
    %v253 = vmul.f32 %v246, %v246
    %v254 = vmul.f32 %v249, %v249
    %v255 = vadd.f32 %v253, %v254
    %v256 = vmul.f32 %v252, %v252
    %v257 = vadd.f32 %v255, %v256
    %v258 = vmul.f32 %v257, %v147
    %v259 = vsel %vm100, %v258, 0.0
    %260 = vadd.xlane.f32.xlu0 %v259
    %v261 = vpop.xlane.xlu0 %260
    %v262 = vrot.slane %v261, 4
    %v263 = vadd.f32 %v261, %v262
    %v264 = vrot.slane %v263, 2
    %v265 = vadd.f32 %v263, %v264
    %v266 = vrot.slane %v265, 1
    %v267 = vadd.f32 %v265, %v266
    %s268 = vtos %v267
    %v269 = vlaneseq
    %v270 = vshrl.u32 %v269, 7
    %vm271 = vcmp.eq.s32.totalorder %v270, 0
    %v272 = vstv %s110
    %v273 = vsel %vm271, %v272, 0.0
    %vm274 = vcmp.eq.s32.totalorder %v270, 1
    %v275 = vstv %s129
    %v276 = vsel %vm274, %v275, 0.0
    %v277 = vadd.f32 %v273, %v276
    %vm278 = vcmp.eq.s32.totalorder %v270, 2
    %v279 = vstv %s139
    %v280 = vsel %vm278, %v279, 0.0
    %v281 = vadd.f32 %v277, %v280
    %vm282 = vcmp.eq.s32.totalorder %v270, 3
    %v283 = vstv %s243
    %v284 = vsel %vm282, %v283, 0.0
    %v285 = vadd.f32 %v281, %v284
    %vm286 = vcmp.eq.s32.totalorder %v270, 4
    %v287 = vstv %s268
    %v288 = vsel %vm286, %v287, 0.0
    %v289 = vadd.f32 %v285, %v288
    %290 = vst [vmem:[#allocation8] sm:$0xff] %v289
    // Predicated region
    $region38: #{tpu_custom_call.1} parent=1 // pred_check
      _
    $region39: #{tpu_custom_call.1} parent=1 // pred_check_branch
      %292 = sbr.rel (0) target = $region41
    $region40: #{tpu_custom_call.1} parent=1 // pred_region
      %s294 = ssub.s32 128, 128
      %295 = vsyncadd [#allocation4], %s294
      %s297 = sshll.u32 [#allocation8], 4
      %s298 = int_to_ptr.vmem [resolvable:$true] %s297
      %300 = dma.vmem_to_hbm [thread:$0]  %s298, 128, %s6, [#allocation4]
    $region41: #{tpu_custom_call.1} parent=1 // pred_fallthru
      _
    // Predicated region
    $region42: #{tpu_custom_call.1} parent=1 // pred_check
      _
    $region43: #{tpu_custom_call.1} parent=1 // pred_check_branch
      %302 = sbr.rel (0) target = $region45
    $region44: #{tpu_custom_call.1} parent=1 // pred_region
      %303 = dma.done [#allocation4], 128
    $region45: #{tpu_custom_call.1} parent=1 // pred_fallthru
      _
    %304 = vsyncpa [#allocation3], 1
    %305 = vsyncpa [#allocation6], 1
    %306 = vsyncpa [#allocation4], 1

</llo_original>
